<compile_context>
chip_gen: v6e
topology: v6e:2x2x1
jax: 0.10.0
libtpu: 0.0.40
codegen_flags: <defaults>
</compile_context>

<pallas_src>
import functools

import jax
import jax.numpy as jnp
from jax.experimental import pallas as pl
from jax.experimental.pallas import tpu as pltpu


def _vmem_capacity_bytes():
    """Physical VMEM per TensorCore; conservative fallback if query fails."""
    try:
        info = pltpu.get_tpu_info()
        cap = getattr(info, "vmem_capacity_bytes", None)
        if cap:
            return int(cap)
    except Exception:
        pass
    return 64 * 1024 * 1024  # v7x per-TC size: safe lower bound everywhere


def _sublane_multiple(dtype):
    """Minimum row-packing multiple for the dtype: 8 f32, 16 bf16, 32 int8."""
    return max(8, 32 // jnp.dtype(dtype).itemsize)


def _pick_tile_b(batch, dim, dtype, vmem_capacity_bytes):
    """Pick the batch tile from a byte budget (not a fixed row cap)."""
    itemsize = jnp.dtype(dtype).itemsize
    sub = _sublane_multiple(dtype)

    # VMEM bytes needed per batch row:
    #   3 inputs x 2 pipeline buffers of the input dtype (DMA blocks)
    # + ~4 f32-sized temporaries (up-casts + elementwise product) so bf16
    #   inputs don't blow VMEM on v7x once tiles get large.
    bytes_per_row = 3 * 2 * dim * itemsize + 4 * dim * 4

    # Spend ~1/3 of physical VMEM: ~42 MiB on v5e/v6e (128 MiB), ~21 MiB on
    # v7x (64 MiB/TC). Gives multi-MiB blocks while leaving compiler headroom.
    budget = vmem_capacity_bytes // 3
    tb = max(1, budget // bytes_per_row)

    # Keep >= 4 grid steps when the batch allows it: preserves DMA overlap
    # in the pipeline and lets the "parallel" axis shard across v7x's two
    # TensorCores. Free on v5e/v6e.
    if batch >= 4 * sub:
        cap = max(sub, (-(-batch // 4) // sub) * sub)
        tb = min(tb, cap)

    tb = min(tb, batch)
    if tb < batch:
        # Block sublane dim must be a multiple of the dtype packing tile
        # unless it spans the whole array.
        tb = max(sub, (tb // sub) * sub)
    return int(tb)


def _triplet_partial_kernel(a_ref, p_ref, n_ref, out_ref, *,
                            margin, batch, tile_b, need_mask):
    """Per-tile partial sum of relu(dist_pos - dist_neg + margin)."""
    a = a_ref[...].astype(jnp.float32)
    p = p_ref[...].astype(jnp.float32)
    n = n_ref[...].astype(jnp.float32)

    # (a-p)^2 - (a-n)^2 summed over dim 1  ==  sum((2a - p - n) * (n - p), 1)
    prod = (2.0 * a - p - n) * (n - p)                 # (TB, D) elementwise (VPU)
    delta = jnp.sum(prod, axis=1, keepdims=True)       # (TB, 1) row reduce (XLU)
    losses = jnp.maximum(delta + margin, 0.0)          # (TB, 1)  F.relu

    if need_mask:
        # Only emitted when B % tile_b != 0: mask rows past the true batch
        # (padded rows may hold garbage -> NaN, but where() discards them).
        i = pl.program_id(0)
        row = jax.lax.broadcasted_iota(jnp.int32, losses.shape, 0) + i * tile_b
        losses = jnp.where(row < batch, losses, 0.0)

    # Lane-dense (1, 128) partial-sum row (unmasked vst); wrapper reads lane 0.
    out_ref[...] = jnp.full((1, 128), jnp.sum(losses), dtype=jnp.float32)


def triplet_loss(anchor, positive, negative, margin, size_average=True,
                 tile_b=None):
    """Pallas TPU implementation of TripletLoss.forward.

    anchor, positive, negative: (B, D) arrays (f32 or bf16).
    Returns a scalar float32 (mean over batch if size_average else sum).
    """
    assert anchor.shape == positive.shape == negative.shape
    assert anchor.dtype == positive.dtype == negative.dtype
    B, D = anchor.shape

    vmem_cap = _vmem_capacity_bytes()
    if tile_b is None:
        tile_b = _pick_tile_b(B, D, anchor.dtype, vmem_cap)
    num_tiles = pl.cdiv(B, tile_b)
    need_mask = (B % tile_b) != 0

    kernel = functools.partial(
        _triplet_partial_kernel,
        margin=float(margin),
        batch=B,
        tile_b=tile_b,
        need_mask=need_mask,
    )

    partials = pl.pallas_call(
        kernel,
        out_shape=jax.ShapeDtypeStruct((num_tiles, 128), jnp.float32),
        grid=(num_tiles,),
        in_specs=[
            pl.BlockSpec((tile_b, D), lambda i: (i, 0)),
            pl.BlockSpec((tile_b, D), lambda i: (i, 0)),
            pl.BlockSpec((tile_b, D), lambda i: (i, 0)),
        ],
        out_specs=pl.BlockSpec((1, 128), lambda i: (i, 0)),
        compiler_params=pltpu.CompilerParams(
            # Independent per-tile partial sums -> safe to shard across the
            # two TensorCores on v7x (no effect on v5e/v6e).
            dimension_semantics=("parallel",),
            # Half of physical VMEM: 64 MiB on v5e/v6e, 32 MiB on v7x.
            vmem_limit_bytes=vmem_cap // 2,
        ),
    )(anchor, positive, negative)

    total = jnp.sum(partials[:, 0])
    if size_average:
        total = total / jnp.float32(B)
    return total


def triplet_loss_ref(anchor, positive, negative, margin, size_average=True):
    a = anchor.astype(jnp.float32)
    p = positive.astype(jnp.float32)
    n = negative.astype(jnp.float32)
    dp = jnp.sum((a - p) ** 2, axis=1)
    dn = jnp.sum((a - n) ** 2, axis=1)
    losses = jnp.maximum(dp - dn + margin, 0.0)
    return jnp.mean(losses) if size_average else jnp.sum(losses)


if __name__ == "__main__":
    key = jax.random.PRNGKey(0)
    k1, k2, k3 = jax.random.split(key, 3)

    margin = 1.0  # TripletLoss(margin=1.0)

    # --- Test 1: small shapes, single tile, no mask -----------------------
    B, D = 8, 32
    anchor = jax.random.normal(k1, (B, D), dtype=jnp.float32)
    positive = jax.random.normal(k2, (B, D), dtype=jnp.float32)
    negative = jax.random.normal(k3, (B, D), dtype=jnp.float32)

    out = jax.block_until_ready(
        triplet_loss(anchor, positive, negative, margin, size_average=True)
    )
    ref = triplet_loss_ref(anchor, positive, negative, margin, size_average=True)
    assert jnp.allclose(out, ref, rtol=1e-5, atol=1e-4), (out, ref)

    out_sum = jax.block_until_ready(
        triplet_loss(anchor, positive, negative, margin, size_average=False)
    )
    ref_sum = triplet_loss_ref(anchor, positive, negative, margin, size_average=False)
    assert jnp.allclose(out_sum, ref_sum, rtol=1e-5, atol=1e-4), (out_sum, ref_sum)

    # --- Test 2: multi-tile grid with ragged last tile (masking path) -----
    B2, D2 = 20, 32
    ka, kp, kn = jax.random.split(jax.random.PRNGKey(1), 3)
    a2 = jax.random.normal(ka, (B2, D2), dtype=jnp.float32)
    p2 = jax.random.normal(kp, (B2, D2), dtype=jnp.float32)
    n2 = jax.random.normal(kn, (B2, D2), dtype=jnp.float32)

    out2 = jax.block_until_ready(
        triplet_loss(a2, p2, n2, margin, size_average=True, tile_b=8)
    )
    ref2 = triplet_loss_ref(a2, p2, n2, margin, size_average=True)
    assert jnp.allclose(out2, ref2, rtol=1e-5, atol=1e-4), (out2, ref2)

    # --- Test 3: bf16 inputs (halved HBM traffic), f32 accumulation -------
    a3 = anchor.astype(jnp.bfloat16)
    p3 = positive.astype(jnp.bfloat16)
    n3 = negative.astype(jnp.bfloat16)
    out3 = jax.block_until_ready(
        triplet_loss(a3, p3, n3, margin, size_average=True)
    )
    ref3 = triplet_loss_ref(a3, p3, n3, margin, size_average=True)
    assert jnp.allclose(out3, ref3, rtol=1e-4, atol=1e-4), (out3, ref3)

    # --- Test 4: auto tile sizing, multi-tile (>=4 tiles), f32 and bf16 ---
    B4, D4 = 256, 32
    k4a, k4p, k4n = jax.random.split(jax.random.PRNGKey(2), 3)
    a4 = jax.random.normal(k4a, (B4, D4), dtype=jnp.float32)
    p4 = jax.random.normal(k4p, (B4, D4), dtype=jnp.float32)
    n4 = jax.random.normal(k4n, (B4, D4), dtype=jnp.float32)

    out4 = jax.block_until_ready(
        triplet_loss(a4, p4, n4, margin, size_average=True)
    )
    ref4 = triplet_loss_ref(a4, p4, n4, margin, size_average=True)
    assert jnp.allclose(out4, ref4, rtol=1e-5, atol=1e-4), (out4, ref4)

    out4b = jax.block_until_ready(
        triplet_loss(a4.astype(jnp.bfloat16), p4.astype(jnp.bfloat16),
                     n4.astype(jnp.bfloat16), margin, size_average=False)
    )
    ref4b = triplet_loss_ref(a4.astype(jnp.bfloat16), p4.astype(jnp.bfloat16),
                             n4.astype(jnp.bfloat16), margin, size_average=False)
    assert jnp.allclose(out4b, ref4b, rtol=1e-3, atol=1e-2), (out4b, ref4b)

    print("KERNEL_OK")
</pallas_src>

<mosaic_0001>
module attributes {stable_mosaic.version = 11 : i64} {
  func.func @_triplet_partial_kernel(%arg0: i32, %arg1: memref<8x32xf32, #tpu.memory_space<vmem>>, %arg2: memref<8x32xf32, #tpu.memory_space<vmem>>, %arg3: memref<8x32xf32, #tpu.memory_space<vmem>>, %arg4: memref<1x128xf32, #tpu.memory_space<vmem>>) attributes {dimension_semantics = [#tpu.dimension_semantics<parallel>], iteration_bounds = array<i64: 1>, scalar_prefetch = 0 : i64, scratch_operands = 0 : i64, tpu.core_type = #tpu.core_type<tc>, window_params = [{transform_indices = @transform_0, window_bounds = array<i64: 8, 32>}, {transform_indices = @transform_1, window_bounds = array<i64: 8, 32>}, {transform_indices = @transform_2, window_bounds = array<i64: 8, 32>}, {transform_indices = @transform_3, window_bounds = array<i64: 1, 128>}]} {
    %c0 = arith.constant 0 : index
    %c0_0 = arith.constant 0 : index
    %0 = vector.load %arg1[%c0, %c0_0] : memref<8x32xf32, #tpu.memory_space<vmem>>, vector<8x32xf32>
    %c0_1 = arith.constant 0 : index
    %c0_2 = arith.constant 0 : index
    %1 = vector.load %arg2[%c0_1, %c0_2] : memref<8x32xf32, #tpu.memory_space<vmem>>, vector<8x32xf32>
    %c0_3 = arith.constant 0 : index
    %c0_4 = arith.constant 0 : index
    %2 = vector.load %arg3[%c0_3, %c0_4] : memref<8x32xf32, #tpu.memory_space<vmem>>, vector<8x32xf32>
    %cst = arith.constant 2.000000e+00 : f32
    %3 = vector.broadcast %cst : f32 to vector<8x32xf32>
    %4 = arith.mulf %3, %0 : vector<8x32xf32>
    %5 = arith.subf %4, %1 : vector<8x32xf32>
    %6 = arith.subf %5, %2 : vector<8x32xf32>
    %7 = arith.subf %2, %1 : vector<8x32xf32>
    %8 = arith.mulf %6, %7 : vector<8x32xf32>
    %cst_5 = arith.constant dense<0.000000e+00> : vector<8xf32>
    %9 = vector.multi_reduction <add>, %8, %cst_5 [1] : vector<8x32xf32> to vector<8xf32>
    %10 = vector.shape_cast %9 : vector<8xf32> to vector<8x1xf32>
    %cst_6 = arith.constant 1.000000e+00 : f32
    %11 = vector.broadcast %cst_6 : f32 to vector<8x1xf32>
    %12 = arith.addf %10, %11 : vector<8x1xf32>
    %cst_7 = arith.constant 0.000000e+00 : f32
    %13 = vector.broadcast %cst_7 : f32 to vector<8x1xf32>
    %14 = arith.maximumf %12, %13 : vector<8x1xf32>
    %15 = vector.shape_cast %14 : vector<8x1xf32> to vector<1x8x1xf32>
    %cst_8 = arith.constant dense<0.000000e+00> : vector<1xf32>
    %16 = vector.multi_reduction <add>, %15, %cst_8 [1, 2] : vector<1x8x1xf32> to vector<1xf32>
    %17 = vector.shape_cast %16 : vector<1xf32> to vector<1x1x1xf32>
    %18 = vector.extract %17[0, 0, 0] : f32 from vector<1x1x1xf32>
    %19 = vector.broadcast %18 : f32 to vector<1x128xf32>
    %c0_9 = arith.constant 0 : index
    %c0_10 = arith.constant 0 : index
    %20 = vector.load %arg4[%c0_9, %c0_10] : memref<1x128xf32, #tpu.memory_space<vmem>>, vector<1x128xf32>
    tpu.vector_store %arg4[%c0_9, %c0_10], %19 {strides = array<i32>} : memref<1x128xf32, #tpu.memory_space<vmem>>, vector<1x128xf32>,
    return
  }
  func.func @transform_0(%arg0: i32) -> (i32, i32) {
    %c0_i32 = arith.constant 0 : i32
    %c0_i32_0 = arith.constant 0 : i32
    return %arg0, %c0_i32 : i32, i32
  }
  func.func @transform_1(%arg0: i32) -> (i32, i32) {
    %c0_i32 = arith.constant 0 : i32
    %c0_i32_0 = arith.constant 0 : i32
    return %arg0, %c0_i32 : i32, i32
  }
  func.func @transform_2(%arg0: i32) -> (i32, i32) {
    %c0_i32 = arith.constant 0 : i32
    %c0_i32_0 = arith.constant 0 : i32
    return %arg0, %c0_i32 : i32, i32
  }
  func.func @transform_3(%arg0: i32) -> (i32, i32) {
    %c0_i32 = arith.constant 0 : i32
    %c0_i32_0 = arith.constant 0 : i32
    return %arg0, %c0_i32 : i32, i32
  }
}

</mosaic_0001>

<llo_original>
// kernel: tpu_custom_call.1
$region0: #{tpu_custom_call.1}
  #allocation0 [shape = 'u32[]', space=smem, size = 0x4, offset = 0x4, fixed_abs, tag = 'smem constant byte address 0x4 - core index']
  #allocation1 [shape = 'u32[144,128]{1,0:T(1,128)}', space=vmem, size = 0x12000, scoped, tag = 'internal scratch']
  %s0 = inlined_call_operand.hbm [shape: f32[8,32], index: 0, kind: input, shape index: {}]
  %s1 = inlined_call_operand.hbm [shape: f32[8,32], index: 1, kind: input, shape index: {}]
  %s2 = inlined_call_operand.hbm [shape: f32[8,32], index: 2, kind: input, shape index: {}]
  %s3 = inlined_call_operand.hbm [shape: f32[1,128], index: 3, kind: output, shape index: {}]
  %s4 = sld [smem:[#allocation0]]
  $region34: #{tpu_custom_call.1} parent=0
    _
  %s6 = ssub.s32 1, %s4
  %s7 = scalar_select 0, %s6, %s4
  $region1: #{tpu_custom_call.1} parent=0
    #allocation2 [shape = 'u8[4096]{0}', space=vmem, size = 0x1000, scoped, tag = 'input window, operand 0, single buffered']
    #allocation3 [shape = 's32[1]{0}', space=sflag, size = 0x4, scoped, tag = 'scoped memory for tpu_custom_call.1']
    #allocation4 [shape = 's32[1]{0}', space=sflag, size = 0x4, scoped, tag = 'scoped memory for tpu_custom_call.1']
    #allocation5 [shape = 'u8[4096]{0}', space=vmem, size = 0x1000, scoped, tag = 'input window, operand 1, single buffered']
    #allocation6 [shape = 's32[1]{0}', space=sflag, size = 0x4, scoped, tag = 'scoped memory for tpu_custom_call.1']
    #allocation7 [shape = 'u8[4096]{0}', space=vmem, size = 0x1000, scoped, tag = 'input window, operand 2, single buffered']
    #allocation8 [shape = 'u8[512]{0}', space=vmem, size = 0x400, scoped, tag = 'output window, operand 0, single buffered']
    %8 = vsyncpa [#allocation3], 0
    %9 = vsyncpa [#allocation6], 0
    %10 = vsyncpa [#allocation4], 0
    // Predicated region
    $region2: #{tpu_custom_call.1} parent=1 // pred_check
      _
    $region3: #{tpu_custom_call.1} parent=1 // pred_check_branch
      %12 = sbr.rel (0) target = $region5
    $region4: #{tpu_custom_call.1} parent=1 // pred_region
      %s14 = ssub.s32 128, 128
      %15 = vsyncadd [#allocation3], %s14
      %s17 = sshll.u32 [#allocation2], 4
      %s18 = int_to_ptr.vmem [resolvable:$true] %s17
      %20 = dma.hbm_to_vmem [thread:$0]  %s0, 128, %s18, [#allocation3]
    $region5: #{tpu_custom_call.1} parent=1 // pred_fallthru
      _
    // Predicated region
    $region6: #{tpu_custom_call.1} parent=1 // pred_check
      _
    $region7: #{tpu_custom_call.1} parent=1 // pred_check_branch
      %22 = sbr.rel (0) target = $region9
    $region8: #{tpu_custom_call.1} parent=1 // pred_region
      %s24 = ssub.s32 128, 128
      %25 = vsyncadd [#allocation6], %s24
      %s27 = sshll.u32 [#allocation5], 4
      %s28 = int_to_ptr.vmem [resolvable:$true] %s27
      %30 = dma.hbm_to_vmem [thread:$0]  %s1, 128, %s28, [#allocation6]
    $region9: #{tpu_custom_call.1} parent=1 // pred_fallthru
      _
    // Predicated region
    $region10: #{tpu_custom_call.1} parent=1 // pred_check
      _
    $region11: #{tpu_custom_call.1} parent=1 // pred_check_branch
      %32 = sbr.rel (0) target = $region13
    $region12: #{tpu_custom_call.1} parent=1 // pred_region
      %s34 = ssub.s32 128, 128
      %35 = vsyncadd [#allocation6], %s34
      %s37 = sshll.u32 [#allocation7], 4
      %s38 = int_to_ptr.vmem [resolvable:$true] %s37
      %40 = dma.hbm_to_vmem [thread:$0]  %s2, 128, %s38, [#allocation6]
    $region13: #{tpu_custom_call.1} parent=1 // pred_fallthru
      _
    // Predicated region
    $region14: #{tpu_custom_call.1} parent=1 // pred_check
      _
    $region15: #{tpu_custom_call.1} parent=1 // pred_check_branch
      %42 = sbr.rel (0) target = $region17
    $region16: #{tpu_custom_call.1} parent=1 // pred_region
      %43 = dma.done [#allocation3], 128
    $region17: #{tpu_custom_call.1} parent=1 // pred_fallthru
      _
    // Predicated region
    $region18: #{tpu_custom_call.1} parent=1 // pred_check
      _
    $region19: #{tpu_custom_call.1} parent=1 // pred_check_branch
      %45 = sbr.rel (0) target = $region21
    $region20: #{tpu_custom_call.1} parent=1 // pred_region
      %46 = dma.done [#allocation6], 128
    $region21: #{tpu_custom_call.1} parent=1 // pred_fallthru
      _
    // Predicated region
    $region22: #{tpu_custom_call.1} parent=1 // pred_check
      _
    $region23: #{tpu_custom_call.1} parent=1 // pred_check_branch
      %48 = sbr.rel (0) target = $region25
    $region24: #{tpu_custom_call.1} parent=1 // pred_region
      %49 = dma.done [#allocation6], 128
    $region25: #{tpu_custom_call.1} parent=1 // pred_fallthru
      _
    %v50 = vld [vmem:[#allocation2] sm:$0xff]
    %v51 = vld [vmem:[#allocation5] sm:$0xff]
    %v52 = vld [vmem:[#allocation7] sm:$0xff]
    %v53 = vmul.f32 %v50, 2.0
    %v54 = vsub.f32 %v53, %v51
    %v55 = vsub.f32 %v54, %v52
    %v56 = vsub.f32 %v52, %v51
    %v57 = vmul.f32 %v55, %v56
    %vm58 = vcmask 261120
    %v59 = vsel %vm58, %v57, 0.0
    %60 = vadd.xlane.f32.xlu0 %v59
    %v61 = vpop.xlane.xlu0 %60
    %v62 = vadd.f32 %v61, 1.0
    %v63 = vmax.f32 %v62, 0.0
    %vm64 = vcmask 7168
    %v65 = vsel %vm64, %v63, 0.0
    %66 = vadd.xlane.f32.xlu0 %v65
    %v67 = vpop.xlane.xlu0 %66
    %v68 = vrot.slane %v67, 4
    %v69 = vadd.f32 %v67, %v68
    %v70 = vrot.slane %v69, 2
    %v71 = vadd.f32 %v69, %v70
    %v72 = vrot.slane %v71, 1
    %v73 = vadd.f32 %v71, %v72
    %s74 = vtos %v73
    %v75 = vstv %s74
    %76 = vst [vmem:[#allocation8] sm:$0x1] %v75
    // Predicated region
    $region26: #{tpu_custom_call.1} parent=1 // pred_check
      _
    $region27: #{tpu_custom_call.1} parent=1 // pred_check_branch
      %78 = sbr.rel (0) target = $region29
    $region28: #{tpu_custom_call.1} parent=1 // pred_region
      %s80 = ssub.s32 16, 16
      %81 = vsyncadd [#allocation4], %s80
      %s83 = sshll.u32 [#allocation8], 4
      %s84 = int_to_ptr.vmem [resolvable:$true] %s83
      %86 = dma.vmem_to_hbm [thread:$0]  %s84, 16, %s3, [#allocation4]
    $region29: #{tpu_custom_call.1} parent=1 // pred_fallthru
      _
    // Predicated region
    $region30: #{tpu_custom_call.1} parent=1 // pred_check
      _
    $region31: #{tpu_custom_call.1} parent=1 // pred_check_branch
      %88 = sbr.rel (0) target = $region33
    $region32: #{tpu_custom_call.1} parent=1 // pred_region
      %89 = dma.done [#allocation4], 16
    $region33: #{tpu_custom_call.1} parent=1 // pred_fallthru
      _
    %90 = vsyncpa [#allocation3], 1
    %91 = vsyncpa [#allocation6], 1
    %92 = vsyncpa [#allocation4], 1

</llo_original>
